<compile_context>
chip_gen: v6e
topology: v6e:2x2x1
jax: 0.10.0
libtpu: 0.0.40
codegen_flags: <defaults>
</compile_context>

<pallas_src>
import jax
import jax.numpy as jnp
from jax.experimental import pallas as pl
from jax.experimental.pallas import tpu as pltpu

# Upper bound on tokens gathered per grid step (actual block size is clamped to
# the workload below).
TB_MAX = 2048


def _make_gather_kernel(pack):
    """Per-block gather kernel: one block-diagonal one-hot matmul on the MXU.

    cid_ref : VMEM (1, rows, pack) int32 -- cid[0, r, p] = ids[r*pack + p] + p*V
              (lane-sparse but tiny; under the HBM DMA-gather design these ids
              would move to SMEM via scalar prefetch instead)
    tbd_ref : VMEM (pack*V, pack*D)      -- block-diagonal copy of the table
    out_ref : VMEM (rows, pack*D)        -- lane-dense output tile
    """

    def kernel(cid_ref, tbd_ref, out_ref):
        tbd = tbd_ref[...]
        rows = out_ref.shape[0]
        kv = tbd.shape[0]                                      # pack * V
        col = jax.lax.broadcasted_iota(jnp.int32, (rows, kv), 1)
        # Single one-hot over all pack slots: onehot[r, p*V + v] = (ids[r,p] == v).
        # cid already carries the +p*V offset, so each slot only ever matches its
        # own V-wide column band and the contributions never overlap.
        onehot = jnp.zeros((rows, kv), tbd.dtype)
        for p in range(pack):                                  # tiny static unroll
            cid_p = cid_ref[0, :, p : p + 1]                   # (rows, 1)
            onehot = onehot + (cid_p == col).astype(tbd.dtype)
        # One MXU push: (rows, pack*V) @ (pack*V, pack*D) -> full lane-dense tile.
        out_ref[...] = jnp.dot(
            onehot, tbd, preferred_element_type=jnp.float32
        ).astype(out_ref.dtype)

    return kernel


def _vmem_limit_bytes(needed_bytes):
    """Generation-aware scoped-VMEM request (leave headroom for Mosaic scratch)."""
    try:
        cap = int(getattr(pltpu.get_tpu_info(), "vmem_capacity_bytes"))
    except Exception:
        cap = 64 << 20  # conservative fallback: smallest per-core VMEM (v7x)
    # Never ask for the whole chip: ~85% of physical, minus fixed headroom.
    usable = max(min(cap - (8 << 20), int(cap * 0.85)), 16 << 20)
    return int(min(max(needed_bytes, 32 << 20), usable))


def embedding_lookup(x, table):
    """x: [B, S] integer ids, table: [V, D] -> [B, S, D]  (== nn.Embedding(x))."""
    B, S = x.shape
    V, D = table.shape
    itemsize = jnp.dtype(table.dtype).itemsize
    num_tokens = B * S

    # Lane packing factor: `pack` consecutive tokens side by side on the lane axis
    # -> 128-lane-dense output stores and a (pack*V)-deep MXU K dimension.
    pack = 128 // D if (D <= 128 and 128 % D == 0) else 1
    # The block-diagonal replica costs pack^2*V*D bytes of VMEM; if the vocab is
    # big enough that this matters, drop the packing.
    if pack > 1 and pack * pack * V * D * itemsize > (16 << 20):
        pack = 1
    # TODO(synk): for production vocab sizes whose table cannot stay VMEM-resident
    # (especially v7x's 64 MiB/TC), switch to an HBM table (memory_space=pl.ANY)
    # with scalar-prefetched ids in SMEM and manually double-buffered per-row DMAs
    # (pltpu.make_async_copy into a VMEM((2, rows, D)) scratch) — O(D) bytes/token
    # instead of O(V) one-hot work.

    # Token-block size: smallest multiple of 8*pack covering the input, capped at
    # TB_MAX. rows = tb // pack is then a multiple of 8 (f32 sublane granularity).
    unit = 8 * pack
    tb = pl.cdiv(max(num_tokens, 1), unit) * unit
    tb = min(tb, max(TB_MAX, unit))
    rows = tb // pack
    out_cols = pack * D  # == 128 whenever pack == 128 // D

    n_blocks = pl.cdiv(max(num_tokens, 1), tb)
    num_padded = n_blocks * tb

    # Flatten, pad (pad ids = 0, sliced away below) and pre-add the per-slot +p*V
    # offset so one one-hot over pack*V columns selects the right diagonal block.
    flat_ids = jnp.zeros((num_padded,), jnp.int32).at[:num_tokens].set(
        x.reshape(num_tokens).astype(jnp.int32)
    )
    cid3 = flat_ids.reshape(n_blocks, rows, pack) + (
        jnp.arange(pack, dtype=jnp.int32) * V
    )

    # Block-diagonal table replica: block p = table (128 KiB for V=64, D=32, pack=4).
    table_bd = (
        jnp.kron(jnp.eye(pack, dtype=table.dtype), table) if pack > 1 else table
    )
    KV, KD = table_bd.shape

    # VMEM budget estimate: resident table (worst case double-buffered), ids and
    # output tiles (lane-padded), one-hot intermediate, plus margin.
    needed = (
        2 * KV * KD * itemsize
        + 2 * rows * 128 * 4
        + 2 * rows * max(out_cols, 128) * itemsize
        + rows * KV * 4
        + (4 << 20)
    )
    compiler_params = pltpu.CompilerParams(
        dimension_semantics=("parallel",),          # independent token blocks
        vmem_limit_bytes=_vmem_limit_bytes(needed),
    )

    kernel = _make_gather_kernel(pack)
    out_shape = jax.ShapeDtypeStruct((n_blocks * rows, out_cols), table.dtype)

    def call(single_buffer_table):
        spec_kwargs = (
            dict(pipeline_mode=pl.Buffered(1)) if single_buffer_table else {}
        )
        table_spec = pl.BlockSpec((KV, KD), lambda i: (0, 0), **spec_kwargs)
        return pl.pallas_call(
            kernel,
            out_shape=out_shape,
            grid_spec=pltpu.PrefetchScalarGridSpec(
                num_scalar_prefetch=0,
                grid=(n_blocks,),
                in_specs=[
                    pl.BlockSpec((1, rows, pack), lambda i: (i, 0, 0)),
                    table_spec,                     # table resident in VMEM
                ],
                out_specs=pl.BlockSpec((rows, out_cols), lambda i: (i, 0)),
            ),
            compiler_params=compiler_params,
        )(cid3, table_bd)

    # Prefer a single-buffered resident table (constant index_map => nothing to
    # double-buffer, halves resident-table VMEM); fall back to the verified
    # default pipelining if this JAX build rejects pipeline_mode / Buffered(1).
    if hasattr(pl, "Buffered"):
        try:
            out2d = call(True)
        except Exception:
            out2d = call(False)
    else:
        out2d = call(False)

    # Undo the lane packing: (num_padded // pack, pack*D) -> (num_padded, D).
    out_flat = out2d.reshape(num_padded, D)[:num_tokens]
    return out_flat.reshape(B, S, D)


if __name__ == "__main__":
    # EmbeddingLayer(dim=32); initialize_with_random(num_vocab=64)
    dim = 32
    num_vocab = 64
    B, S = 2, 8

    key = jax.random.PRNGKey(0)
    k_table, k_idx = jax.random.split(key)

    # nn.Embedding default init: weight ~ N(0, 1), float32 (module default dtype).
    table = jax.random.normal(k_table, (num_vocab, dim), dtype=jnp.float32)
    x = jax.random.randint(k_idx, (B, S), 0, num_vocab, dtype=jnp.int32)

    out = embedding_lookup(x, table)
    out = jax.block_until_ready(out)

    # correctness check against plain JAX gather (== torch embedding semantics)
    ref = table[x]
    assert out.shape == (B, S, dim)
    assert jnp.allclose(out, ref, rtol=1e-5, atol=1e-5), "mismatch vs reference gather"

    print("KERNEL_OK")
</pallas_src>

<mosaic_0001>
module attributes {stable_mosaic.version = 11 : i64} {
  func.func @kernel(%arg0: i32, %arg1: memref<1x8x4xi32, #tpu.memory_space<vmem>>, %arg2: memref<256x128xf32, #tpu.memory_space<vmem>>, %arg3: memref<8x128xf32, #tpu.memory_space<vmem>>) attributes {dimension_semantics = [#tpu.dimension_semantics<parallel>], iteration_bounds = array<i64: 1>, scalar_prefetch = 0 : i64, scratch_operands = 0 : i64, tpu.core_type = #tpu.core_type<tc>, window_params = [{transform_indices = @transform_0, window_bounds = array<i64: 1, 8, 4>}, {pipeline_mode = #tpu.pipeline_mode<synchronous>, transform_indices = @transform_1, window_bounds = array<i64: 256, 128>}, {transform_indices = @transform_2, window_bounds = array<i64: 8, 128>}]} {
    %c0 = arith.constant 0 : index
    %c0_0 = arith.constant 0 : index
    %0 = vector.load %arg2[%c0, %c0_0] : memref<256x128xf32, #tpu.memory_space<vmem>>, vector<256x128xf32>
    %1 = tpu.iota {dimensions = array<i32: 1>} : vector<8x256xi32>
    %cst = arith.constant 0.000000e+00 : f32
    %2 = vector.broadcast %cst : f32 to vector<8x256xf32>
    %c0_1 = arith.constant 0 : index
    %c0_2 = arith.constant 0 : index
    %c0_3 = arith.constant 0 : index
    %3 = vector.load %arg1[%c0_1, %c0_2, %c0_3] : memref<1x8x4xi32, #tpu.memory_space<vmem>>, vector<1x8x1xi32>
    %4 = vector.shape_cast %3 : vector<1x8x1xi32> to vector<8x1xi32>
    %5 = vector.broadcast %4 : vector<8x1xi32> to vector<8x256xi32>
    %6 = arith.cmpi eq, %5, %1 : vector<8x256xi32>
    %7 = arith.extui %6 : vector<8x256xi1> to vector<8x256xi32>
    %8 = arith.sitofp %7 : vector<8x256xi32> to vector<8x256xf32>
    %9 = arith.addf %2, %8 : vector<8x256xf32>
    %c0_4 = arith.constant 0 : index
    %c0_5 = arith.constant 0 : index
    %c1 = arith.constant 1 : index
    %10 = vector.load %arg1[%c0_4, %c0_5, %c1] : memref<1x8x4xi32, #tpu.memory_space<vmem>>, vector<1x8x1xi32>
    %11 = vector.shape_cast %10 : vector<1x8x1xi32> to vector<8x1xi32>
    %12 = vector.broadcast %11 : vector<8x1xi32> to vector<8x256xi32>
    %13 = arith.cmpi eq, %12, %1 : vector<8x256xi32>
    %14 = arith.extui %13 : vector<8x256xi1> to vector<8x256xi32>
    %15 = arith.sitofp %14 : vector<8x256xi32> to vector<8x256xf32>
    %16 = arith.addf %9, %15 : vector<8x256xf32>
    %c0_6 = arith.constant 0 : index
    %c0_7 = arith.constant 0 : index
    %c2 = arith.constant 2 : index
    %17 = vector.load %arg1[%c0_6, %c0_7, %c2] : memref<1x8x4xi32, #tpu.memory_space<vmem>>, vector<1x8x1xi32>
    %18 = vector.shape_cast %17 : vector<1x8x1xi32> to vector<8x1xi32>
    %19 = vector.broadcast %18 : vector<8x1xi32> to vector<8x256xi32>
    %20 = arith.cmpi eq, %19, %1 : vector<8x256xi32>
    %21 = arith.extui %20 : vector<8x256xi1> to vector<8x256xi32>
    %22 = arith.sitofp %21 : vector<8x256xi32> to vector<8x256xf32>
    %23 = arith.addf %16, %22 : vector<8x256xf32>
    %c0_8 = arith.constant 0 : index
    %c0_9 = arith.constant 0 : index
    %c3 = arith.constant 3 : index
    %24 = vector.load %arg1[%c0_8, %c0_9, %c3] : memref<1x8x4xi32, #tpu.memory_space<vmem>>, vector<1x8x1xi32>
    %25 = vector.shape_cast %24 : vector<1x8x1xi32> to vector<8x1xi32>
    %26 = vector.broadcast %25 : vector<8x1xi32> to vector<8x256xi32>
    %27 = arith.cmpi eq, %26, %1 : vector<8x256xi32>
    %28 = arith.extui %27 : vector<8x256xi1> to vector<8x256xi32>
    %29 = arith.sitofp %28 : vector<8x256xi32> to vector<8x256xf32>
    %30 = arith.addf %23, %29 : vector<8x256xf32>
    %cst_10 = arith.constant dense<0.000000e+00> : vector<8x128xf32>
    %31 = tpu.matmul %30, %0, %cst_10 {dimension_numbers = #tpu.dot_dimension_numbers<[1], [0], [0], [1], [0, 0, 1, 1], [], []>} : vector<8x256xf32>, vector<256x128xf32>, vector<8x128xf32> -> vector<8x128xf32>
    %c0_11 = arith.constant 0 : index
    %c0_12 = arith.constant 0 : index
    %32 = vector.load %arg3[%c0_11, %c0_12] : memref<8x128xf32, #tpu.memory_space<vmem>>, vector<8x128xf32>
    tpu.vector_store %arg3[%c0_11, %c0_12], %31 {strides = array<i32>} : memref<8x128xf32, #tpu.memory_space<vmem>>, vector<8x128xf32>,
    return
  }
  func.func @transform_0(%arg0: i32) -> (i32, i32, i32) {
    %c0_i32 = arith.constant 0 : i32
    %c0_i32_0 = arith.constant 0 : i32
    %c0_i32_1 = arith.constant 0 : i32
    return %arg0, %c0_i32, %c0_i32_0 : i32, i32, i32
  }
  func.func @transform_1(%arg0: i32) -> (i32, i32) {
    %c0_i32 = arith.constant 0 : i32
    %c0_i32_0 = arith.constant 0 : i32
    %c0_i32_1 = arith.constant 0 : i32
    return %c0_i32, %c0_i32_0 : i32, i32
  }
  func.func @transform_2(%arg0: i32) -> (i32, i32) {
    %c0_i32 = arith.constant 0 : i32
    %c0_i32_0 = arith.constant 0 : i32
    return %arg0, %c0_i32 : i32, i32
  }
}

module attributes {stable_mosaic.version = 11 : i64} {
  func.func @kernel(%arg0: i32, %arg1: memref<1x8x4xi32, #tpu.memory_space<vmem>>, %arg2: memref<256x128xf32, #tpu.memory_space<vmem>>, %arg3: memref<8x128xf32, #tpu.memory_space<vmem>>) attributes {dimension_semantics = [#tpu.dimension_semantics<parallel>], iteration_bounds = array<i64: 1>, scalar_prefetch = 0 : i64, scratch_operands = 0 : i64, tpu.core_type = #tpu.core_type<tc>, window_params = [{transform_indices = @transform_0, window_bounds = array<i64: 1, 8, 4>}, {pipeline_mode = #tpu.pipeline_mode<synchronous>, transform_indices = @transform_1, window_bounds = array<i64: 256, 128>}, {transform_indices = @transform_2, window_bounds = array<i64: 8, 128>}]} {
    %c0 = arith.constant 0 : index
    %c0_0 = arith.constant 0 : index
    %0 = vector.load %arg2[%c0, %c0_0] : memref<256x128xf32, #tpu.memory_space<vmem>>, vector<256x128xf32>
    %1 = tpu.iota {dimensions = array<i32: 1>} : vector<8x256xi32>
    %cst = arith.constant 0.000000e+00 : f32
    %2 = vector.broadcast %cst : f32 to vector<8x256xf32>
    %c0_1 = arith.constant 0 : index
    %c0_2 = arith.constant 0 : index
    %c0_3 = arith.constant 0 : index
    %3 = vector.load %arg1[%c0_1, %c0_2, %c0_3] : memref<1x8x4xi32, #tpu.memory_space<vmem>>, vector<1x8x1xi32>
    %4 = vector.shape_cast %3 : vector<1x8x1xi32> to vector<8x1xi32>
    %5 = vector.broadcast %4 : vector<8x1xi32> to vector<8x256xi32>
    %6 = arith.cmpi eq, %5, %1 : vector<8x256xi32>
    %7 = arith.extui %6 : vector<8x256xi1> to vector<8x256xi32>
    %8 = arith.sitofp %7 : vector<8x256xi32> to vector<8x256xf32>
    %9 = arith.addf %2, %8 : vector<8x256xf32>
    %c0_4 = arith.constant 0 : index
    %c0_5 = arith.constant 0 : index
    %c1 = arith.constant 1 : index
    %10 = vector.load %arg1[%c0_4, %c0_5, %c1] : memref<1x8x4xi32, #tpu.memory_space<vmem>>, vector<1x8x1xi32>
    %11 = vector.shape_cast %10 : vector<1x8x1xi32> to vector<8x1xi32>
    %12 = vector.broadcast %11 : vector<8x1xi32> to vector<8x256xi32>
    %13 = arith.cmpi eq, %12, %1 : vector<8x256xi32>
    %14 = arith.extui %13 : vector<8x256xi1> to vector<8x256xi32>
    %15 = arith.sitofp %14 : vector<8x256xi32> to vector<8x256xf32>
    %16 = arith.addf %9, %15 : vector<8x256xf32>
    %c0_6 = arith.constant 0 : index
    %c0_7 = arith.constant 0 : index
    %c2 = arith.constant 2 : index
    %17 = vector.load %arg1[%c0_6, %c0_7, %c2] : memref<1x8x4xi32, #tpu.memory_space<vmem>>, vector<1x8x1xi32>
    %18 = vector.shape_cast %17 : vector<1x8x1xi32> to vector<8x1xi32>
    %19 = vector.broadcast %18 : vector<8x1xi32> to vector<8x256xi32>
    %20 = arith.cmpi eq, %19, %1 : vector<8x256xi32>
    %21 = arith.extui %20 : vector<8x256xi1> to vector<8x256xi32>
    %22 = arith.sitofp %21 : vector<8x256xi32> to vector<8x256xf32>
    %23 = arith.addf %16, %22 : vector<8x256xf32>
    %c0_8 = arith.constant 0 : index
    %c0_9 = arith.constant 0 : index
    %c3 = arith.constant 3 : index
    %24 = vector.load %arg1[%c0_8, %c0_9, %c3] : memref<1x8x4xi32, #tpu.memory_space<vmem>>, vector<1x8x1xi32>
    %25 = vector.shape_cast %24 : vector<1x8x1xi32> to vector<8x1xi32>
    %26 = vector.broadcast %25 : vector<8x1xi32> to vector<8x256xi32>
    %27 = arith.cmpi eq, %26, %1 : vector<8x256xi32>
    %28 = arith.extui %27 : vector<8x256xi1> to vector<8x256xi32>
    %29 = arith.sitofp %28 : vector<8x256xi32> to vector<8x256xf32>
    %30 = arith.addf %23, %29 : vector<8x256xf32>
    %cst_10 = arith.constant dense<0.000000e+00> : vector<8x128xf32>
    %31 = tpu.matmul %30, %0, %cst_10 {dimension_numbers = #tpu.dot_dimension_numbers<[1], [0], [0], [1], [0, 0, 1, 1], [], []>} : vector<8x256xf32>, vector<256x128xf32>, vector<8x128xf32> -> vector<8x128xf32>
    %c0_11 = arith.constant 0 : index
    %c0_12 = arith.constant 0 : index
    %32 = vector.load %arg3[%c0_11, %c0_12] : memref<8x128xf32, #tpu.memory_space<vmem>>, vector<8x128xf32>
    tpu.vector_store %arg3[%c0_11, %c0_12], %31 {strides = array<i32>} : memref<8x128xf32, #tpu.memory_space<vmem>>, vector<8x128xf32>,
    return
  }
  func.func @transform_0(%arg0: i32) -> (i32, i32, i32) {
    %c0_i32 = arith.constant 0 : i32
    %c0_i32_0 = arith.constant 0 : i32
    %c0_i32_1 = arith.constant 0 : i32
    return %arg0, %c0_i32, %c0_i32_0 : i32, i32, i32
  }
  func.func @transform_1(%arg0: i32) -> (i32, i32) {
    %c0_i32 = arith.constant 0 : i32
    %c0_i32_0 = arith.constant 0 : i32
    %c0_i32_1 = arith.constant 0 : i32
    return %c0_i32, %c0_i32_0 : i32, i32
  }
  func.func @transform_2(%arg0: i32) -> (i32, i32) {
    %c0_i32 = arith.constant 0 : i32
    %c0_i32_0 = arith.constant 0 : i32
    return %arg0, %c0_i32 : i32, i32
  }
}

</mosaic_0001>

<llo_original>
// kernel: tpu_custom_call.1
$region0: #{tpu_custom_call.1}
  #allocation0 [shape = 'u32[]', space=smem, size = 0x4, offset = 0x4, fixed_abs, tag = 'smem constant byte address 0x4 - core index']
  #allocation1 [shape = 'u32[144,128]{1,0:T(1,128)}', space=vmem, size = 0x12000, scoped, tag = 'internal scratch']
  %s0 = inlined_call_operand.vmem [shape: s32[1,8,4], index: 0, kind: input, shape index: {}]
  %s1 = inlined_call_operand.hbm [shape: f32[256,128], index: 1, kind: input, shape index: {}]
  %s2 = inlined_call_operand.hbm [shape: f32[8,128], index: 2, kind: output, shape index: {}]
  %s3 = sld [smem:[#allocation0]]
  $region22: #{tpu_custom_call.1} parent=0
    _
  %s5 = ssub.s32 1, %s3
  %s6 = scalar_select 0, %s5, %s3
  $region1: #{tpu_custom_call.1} parent=0
    #allocation2 [shape = 'u8[131072]{0}', space=vmem, size = 0x20000, scoped, tag = 'input window, operand 1, single buffered']
    #allocation3 [shape = 's32[1]{0}', space=sflag, size = 0x4, scoped, tag = 'scoped memory for tpu_custom_call.1']
    #allocation4 [shape = 's32[1]{0}', space=sflag, size = 0x4, scoped, tag = 'scoped memory for tpu_custom_call.1']
    #allocation5 [shape = 'u8[4096]{0}', space=vmem, size = 0x1000, scoped, tag = 'output window, operand 0, single buffered']
    %7 = vsyncpa [#allocation3], 0
    %8 = vsyncpa [#allocation4], 0
    // Predicated region
    $region2: #{tpu_custom_call.1} parent=1 // pred_check
      _
    $region3: #{tpu_custom_call.1} parent=1 // pred_check_branch
      %10 = sbr.rel (0) target = $region5
    $region4: #{tpu_custom_call.1} parent=1 // pred_region
      _
    $region5: #{tpu_custom_call.1} parent=1 // pred_fallthru
      _
    // Predicated region
    $region6: #{tpu_custom_call.1} parent=1 // pred_check
      _
    $region7: #{tpu_custom_call.1} parent=1 // pred_check_branch
      %12 = sbr.rel (0) target = $region9
    $region8: #{tpu_custom_call.1} parent=1 // pred_region
      %s14 = ssub.s32 4096, 4096
      %15 = vsyncadd [#allocation3], %s14
      %s16 = sshll.u32 [#allocation2], 4
      %s17 = int_to_ptr.vmem [resolvable:$true] %s16
      %22 = dma.hbm_to_vmem [thread:$0]  %s1, 4096, %s17, [#allocation3], 128, 128, 8
    $region9: #{tpu_custom_call.1} parent=1 // pred_fallthru
      _
    // Predicated region
    $region10: #{tpu_custom_call.1} parent=1 // pred_check
      _
    $region11: #{tpu_custom_call.1} parent=1 // pred_check_branch
      %24 = sbr.rel (0) target = $region13
    $region12: #{tpu_custom_call.1} parent=1 // pred_region
      %25 = dma.done [#allocation3], 4096
    $region13: #{tpu_custom_call.1} parent=1 // pred_fallthru
      _
    %v26 = vld [vmem:[#allocation2] sm:$0xff]
    %v27 = vld [vmem:[#allocation2 + $0x8] sm:$0xff]
    %v28 = vld [vmem:[#allocation2 + $0x10] sm:$0xff]
    %v29 = vld [vmem:[#allocation2 + $0x18] sm:$0xff]
    %v30 = vld [vmem:[#allocation2 + $0x20] sm:$0xff]
    %v31 = vld [vmem:[#allocation2 + $0x28] sm:$0xff]
    %v32 = vld [vmem:[#allocation2 + $0x30] sm:$0xff]
    %v33 = vld [vmem:[#allocation2 + $0x38] sm:$0xff]
    %v34 = vld [vmem:[#allocation2 + $0x40] sm:$0xff]
    %v35 = vld [vmem:[#allocation2 + $0x48] sm:$0xff]
    %v36 = vld [vmem:[#allocation2 + $0x50] sm:$0xff]
    %v37 = vld [vmem:[#allocation2 + $0x58] sm:$0xff]
    %v38 = vld [vmem:[#allocation2 + $0x60] sm:$0xff]
    %v39 = vld [vmem:[#allocation2 + $0x68] sm:$0xff]
    %v40 = vld [vmem:[#allocation2 + $0x70] sm:$0xff]
    %v41 = vld [vmem:[#allocation2 + $0x78] sm:$0xff]
    %v42 = vld [vmem:[#allocation2 + $0x80] sm:$0xff]
    %v43 = vld [vmem:[#allocation2 + $0x88] sm:$0xff]
    %v44 = vld [vmem:[#allocation2 + $0x90] sm:$0xff]
    %v45 = vld [vmem:[#allocation2 + $0x98] sm:$0xff]
    %v46 = vld [vmem:[#allocation2 + $0xa0] sm:$0xff]
    %v47 = vld [vmem:[#allocation2 + $0xa8] sm:$0xff]
    %v48 = vld [vmem:[#allocation2 + $0xb0] sm:$0xff]
    %v49 = vld [vmem:[#allocation2 + $0xb8] sm:$0xff]
    %v50 = vld [vmem:[#allocation2 + $0xc0] sm:$0xff]
    %v51 = vld [vmem:[#allocation2 + $0xc8] sm:$0xff]
    %v52 = vld [vmem:[#allocation2 + $0xd0] sm:$0xff]
    %v53 = vld [vmem:[#allocation2 + $0xd8] sm:$0xff]
    %v54 = vld [vmem:[#allocation2 + $0xe0] sm:$0xff]
    %v55 = vld [vmem:[#allocation2 + $0xe8] sm:$0xff]
    %v56 = vld [vmem:[#allocation2 + $0xf0] sm:$0xff]
    %v57 = vld [vmem:[#allocation2 + $0xf8] sm:$0xff]
    %v58 = vlaneseq
    %v59 = vand.u32 %v58, 127
    %v60 = vadd.s32 %v59, 128
    %v61 = vld [vmem:[%s0] sm:$0xff]
    %62 = vset.pattern.permute.xlu0 0
    %63 = vperm.xlu0 %62, %v61
    %v64 = vpop.permute.xlu0 %63
    %vm65 = vcmp.eq.s32.totalorder %v64, %v59
    %vm66 = vcmp.eq.s32.totalorder %v64, %v60
    %v67 = vsel %vm65, 1, 0
    %v68 = vsel %vm66, 1, 0
    %v69 = vcvt.s32.f32 %v67
    %v70 = vcvt.s32.f32 %v68
    %v71 = vadd.f32 %v69, 0.0
    %v72 = vadd.f32 %v70, 0.0
    %73 = vset.pattern.permute.xlu0 1
    %74 = vperm.xlu0 %73, %v61
    %v75 = vpop.permute.xlu0 %74
    %vm76 = vcmp.eq.s32.totalorder %v75, %v59
    %vm77 = vcmp.eq.s32.totalorder %v75, %v60
    %v78 = vsel %vm76, 1, 0
    %v79 = vsel %vm77, 1, 0
    %v80 = vcvt.s32.f32 %v78
    %v81 = vcvt.s32.f32 %v79
    %v82 = vadd.f32 %v71, %v80
    %v83 = vadd.f32 %v72, %v81
    %84 = vset.pattern.permute.xlu0 2
    %85 = vperm.xlu0 %84, %v61
    %v86 = vpop.permute.xlu0 %85
    %vm87 = vcmp.eq.s32.totalorder %v86, %v59
    %vm88 = vcmp.eq.s32.totalorder %v86, %v60
    %v89 = vsel %vm87, 1, 0
    %v90 = vsel %vm88, 1, 0
    %v91 = vcvt.s32.f32 %v89
    %v92 = vcvt.s32.f32 %v90
    %v93 = vadd.f32 %v82, %v91
    %v94 = vadd.f32 %v83, %v92
    %95 = vset.pattern.permute.xlu0 3
    %96 = vperm.xlu0 %95, %v61
    %v97 = vpop.permute.xlu0 %96
    %vm98 = vcmp.eq.s32.totalorder %v97, %v59
    %vm99 = vcmp.eq.s32.totalorder %v97, %v60
    %v100 = vsel %vm98, 1, 0
    %v101 = vsel %vm99, 1, 0
    %v102 = vcvt.s32.f32 %v100
    %v103 = vcvt.s32.f32 %v101
    %v104 = vadd.f32 %v93, %v102
    %v105 = vadd.f32 %v94, %v103
    %106 = vmatprep.subr.mxu0 0.0
    %107 = vmatpush1.msra.mxu0 %v41
    %108 = vmatprep.subr.mxu0 0.0
    %109 = vmatpush1.msra.mxu0 %v40
    %110 = vmatprep.subr.mxu0 0.0
    %111 = vmatpush1.msra.mxu0 %v39
    %112 = vmatprep.subr.mxu0 0.0
    %113 = vmatpush1.msra.mxu0 %v38
    %114 = vmatprep.subr.mxu0 0.0
    %115 = vmatpush1.msra.mxu0 %v37
    %116 = vmatprep.subr.mxu0 0.0
    %117 = vmatpush1.msra.mxu0 %v36
    %118 = vmatprep.subr.mxu0 0.0
    %119 = vmatpush1.msra.mxu0 %v35
    %120 = vmatprep.subr.mxu0 0.0
    %121 = vmatpush1.msra.mxu0 %v34
    %122 = vmatprep.subr.mxu0 0.0
    %123 = vmatpush1.msra.mxu0 %v33
    %124 = vmatprep.subr.mxu0 0.0
    %125 = vmatpush1.msra.mxu0 %v32
    %126 = vmatprep.subr.mxu0 0.0
    %127 = vmatpush1.msra.mxu0 %v31
    %128 = vmatprep.subr.mxu0 0.0
    %129 = vmatpush1.msra.mxu0 %v30
    %130 = vmatprep.subr.mxu0 0.0
    %131 = vmatpush1.msra.mxu0 %v29
    %132 = vmatprep.subr.mxu0 0.0
    %133 = vmatpush1.msra.mxu0 %v28
    %134 = vmatprep.subr.mxu0 0.0
    %135 = vmatpush1.msra.mxu0 %v27
    %136 = vmatprep.subr.mxu0 0.0
    %137 = vmatpush1.msra.mxu0 %v26
    %138 = vmatprep.subr.mxu0 0.0
    %139 = vmatpush2.msra.mxu0 %v57
    %140 = vmatprep.subr.mxu0 0.0
    %141 = vmatpush2.msra.mxu0 %v56
    %142 = vmatprep.subr.mxu0 0.0
    %143 = vmatpush2.msra.mxu0 %v55
    %144 = vmatprep.subr.mxu0 0.0
    %145 = vmatpush2.msra.mxu0 %v54
    %146 = vmatprep.subr.mxu0 0.0
    %147 = vmatpush2.msra.mxu0 %v53
    %148 = vmatprep.subr.mxu0 0.0
    %149 = vmatpush2.msra.mxu0 %v52
    %150 = vmatprep.subr.mxu0 0.0
    %151 = vmatpush2.msra.mxu0 %v51
    %152 = vmatprep.subr.mxu0 0.0
    %153 = vmatpush2.msra.mxu0 %v50
    %154 = vmatprep.subr.mxu0 0.0
    %155 = vmatpush2.msra.mxu0 %v49
    %156 = vmatprep.subr.mxu0 0.0
    %157 = vmatpush2.msra.mxu0 %v48
    %158 = vmatprep.subr.mxu0 0.0
    %159 = vmatpush2.msra.mxu0 %v47
    %160 = vmatprep.subr.mxu0 0.0
    %161 = vmatpush2.msra.mxu0 %v46
    %162 = vmatprep.subr.mxu0 0.0
    %163 = vmatpush2.msra.mxu0 %v45
    %164 = vmatprep.subr.mxu0 0.0
    %165 = vmatpush2.msra.mxu0 %v44
    %166 = vmatprep.subr.mxu0 0.0
    %167 = vmatpush2.msra.mxu0 %v43
    %168 = vmatprep.subr.mxu0 0.0
    %169 = vmatpush2.msra.mxu0 %v42
    %170 = vmatprep.mubr.f32.mxu0 %v105
    %171 = vmatmul.mubr.f32.gmra.mxu0 %v104
    %v172 = vpop.f32.mrf.mxu0
    %v173 = vadd.f32 0.0, %v172
    %v174 = vpop.f32.mrf.mxu0
    %175 = vdwg.mxu0
    %176 = vst [vmem:[#allocation5] sm:$0xff] %v173
    // Predicated region
    $region14: #{tpu_custom_call.1} parent=1 // pred_check
      _
    $region15: #{tpu_custom_call.1} parent=1 // pred_check_branch
      %178 = sbr.rel (0) target = $region17
    $region16: #{tpu_custom_call.1} parent=1 // pred_region
      %s180 = ssub.s32 128, 128
      %181 = vsyncadd [#allocation4], %s180
      %s183 = sshll.u32 [#allocation5], 4
      %s184 = int_to_ptr.vmem [resolvable:$true] %s183
      %186 = dma.vmem_to_hbm [thread:$0]  %s184, 128, %s2, [#allocation4]
    $region17: #{tpu_custom_call.1} parent=1 // pred_fallthru
      _
    // Predicated region
    $region18: #{tpu_custom_call.1} parent=1 // pred_check
      _
    $region19: #{tpu_custom_call.1} parent=1 // pred_check_branch
      %188 = sbr.rel (0) target = $region21
    $region20: #{tpu_custom_call.1} parent=1 // pred_region
      %189 = dma.done [#allocation4], 128
    $region21: #{tpu_custom_call.1} parent=1 // pred_fallthru
      _
    %190 = vsyncpa [#allocation3], 1
    %191 = vsyncpa [#allocation4], 1

// kernel: tpu_custom_call.1
$region0: #{tpu_custom_call.1}
  #allocation0 [shape = 'u32[]', space=smem, size = 0x4, offset = 0x4, fixed_abs, tag = 'smem constant byte address 0x4 - core index']
  #allocation1 [shape = 'u32[144,128]{1,0:T(1,128)}', space=vmem, size = 0x12000, scoped, tag = 'internal scratch']
  %s0 = inlined_call_operand.vmem [shape: s32[1,8,4], index: 0, kind: input, shape index: {}]
  %s1 = inlined_call_operand.hbm [shape: f32[256,128], index: 1, kind: input, shape index: {}]
  %s2 = inlined_call_operand.hbm [shape: f32[8,128], index: 2, kind: output, shape index: {}]
  %s3 = sld [smem:[#allocation0]]
  $region22: #{tpu_custom_call.1} parent=0
    _
  %s5 = ssub.s32 1, %s3
  %s6 = scalar_select 0, %s5, %s3
  $region1: #{tpu_custom_call.1} parent=0
    #allocation2 [shape = 'u8[131072]{0}', space=vmem, size = 0x20000, scoped, tag = 'input window, operand 1, single buffered']
    #allocation3 [shape = 's32[1]{0}', space=sflag, size = 0x4, scoped, tag = 'scoped memory for tpu_custom_call.1']
    #allocation4 [shape = 's32[1]{0}', space=sflag, size = 0x4, scoped, tag = 'scoped memory for tpu_custom_call.1']
    #allocation5 [shape = 'u8[4096]{0}', space=vmem, size = 0x1000, scoped, tag = 'output window, operand 0, single buffered']
    %7 = vsyncpa [#allocation3], 0
    %8 = vsyncpa [#allocation4], 0
    // Predicated region
    $region2: #{tpu_custom_call.1} parent=1 // pred_check
      _
    $region3: #{tpu_custom_call.1} parent=1 // pred_check_branch
      %10 = sbr.rel (0) target = $region5
    $region4: #{tpu_custom_call.1} parent=1 // pred_region
      _
    $region5: #{tpu_custom_call.1} parent=1 // pred_fallthru
      _
    // Predicated region
    $region6: #{tpu_custom_call.1} parent=1 // pred_check
      _
    $region7: #{tpu_custom_call.1} parent=1 // pred_check_branch
      %12 = sbr.rel (0) target = $region9
    $region8: #{tpu_custom_call.1} parent=1 // pred_region
      %s14 = ssub.s32 4096, 4096
      %15 = vsyncadd [#allocation3], %s14
      %s16 = sshll.u32 [#allocation2], 4
      %s17 = int_to_ptr.vmem [resolvable:$true] %s16
      %22 = dma.hbm_to_vmem [thread:$0]  %s1, 4096, %s17, [#allocation3], 128, 128, 8
    $region9: #{tpu_custom_call.1} parent=1 // pred_fallthru
      _
    // Predicated region
    $region10: #{tpu_custom_call.1} parent=1 // pred_check
      _
    $region11: #{tpu_custom_call.1} parent=1 // pred_check_branch
      %24 = sbr.rel (0) target = $region13
    $region12: #{tpu_custom_call.1} parent=1 // pred_region
      %25 = dma.done [#allocation3], 4096
    $region13: #{tpu_custom_call.1} parent=1 // pred_fallthru
      _
    %v26 = vld [vmem:[#allocation2] sm:$0xff]
    %v27 = vld [vmem:[#allocation2 + $0x8] sm:$0xff]
    %v28 = vld [vmem:[#allocation2 + $0x10] sm:$0xff]
    %v29 = vld [vmem:[#allocation2 + $0x18] sm:$0xff]
    %v30 = vld [vmem:[#allocation2 + $0x20] sm:$0xff]
    %v31 = vld [vmem:[#allocation2 + $0x28] sm:$0xff]
    %v32 = vld [vmem:[#allocation2 + $0x30] sm:$0xff]
    %v33 = vld [vmem:[#allocation2 + $0x38] sm:$0xff]
    %v34 = vld [vmem:[#allocation2 + $0x40] sm:$0xff]
    %v35 = vld [vmem:[#allocation2 + $0x48] sm:$0xff]
    %v36 = vld [vmem:[#allocation2 + $0x50] sm:$0xff]
    %v37 = vld [vmem:[#allocation2 + $0x58] sm:$0xff]
    %v38 = vld [vmem:[#allocation2 + $0x60] sm:$0xff]
    %v39 = vld [vmem:[#allocation2 + $0x68] sm:$0xff]
    %v40 = vld [vmem:[#allocation2 + $0x70] sm:$0xff]
    %v41 = vld [vmem:[#allocation2 + $0x78] sm:$0xff]
    %v42 = vld [vmem:[#allocation2 + $0x80] sm:$0xff]
    %v43 = vld [vmem:[#allocation2 + $0x88] sm:$0xff]
    %v44 = vld [vmem:[#allocation2 + $0x90] sm:$0xff]
    %v45 = vld [vmem:[#allocation2 + $0x98] sm:$0xff]
    %v46 = vld [vmem:[#allocation2 + $0xa0] sm:$0xff]
    %v47 = vld [vmem:[#allocation2 + $0xa8] sm:$0xff]
    %v48 = vld [vmem:[#allocation2 + $0xb0] sm:$0xff]
    %v49 = vld [vmem:[#allocation2 + $0xb8] sm:$0xff]
    %v50 = vld [vmem:[#allocation2 + $0xc0] sm:$0xff]
    %v51 = vld [vmem:[#allocation2 + $0xc8] sm:$0xff]
    %v52 = vld [vmem:[#allocation2 + $0xd0] sm:$0xff]
    %v53 = vld [vmem:[#allocation2 + $0xd8] sm:$0xff]
    %v54 = vld [vmem:[#allocation2 + $0xe0] sm:$0xff]
    %v55 = vld [vmem:[#allocation2 + $0xe8] sm:$0xff]
    %v56 = vld [vmem:[#allocation2 + $0xf0] sm:$0xff]
    %v57 = vld [vmem:[#allocation2 + $0xf8] sm:$0xff]
    %v58 = vlaneseq
    %v59 = vand.u32 %v58, 127
    %v60 = vadd.s32 %v59, 128
    %v61 = vld [vmem:[%s0] sm:$0xff]
    %62 = vset.pattern.permute.xlu0 0
    %63 = vperm.xlu0 %62, %v61
    %v64 = vpop.permute.xlu0 %63
    %vm65 = vcmp.eq.s32.totalorder %v64, %v59
    %vm66 = vcmp.eq.s32.totalorder %v64, %v60
    %v67 = vsel %vm65, 1, 0
    %v68 = vsel %vm66, 1, 0
    %v69 = vcvt.s32.f32 %v67
    %v70 = vcvt.s32.f32 %v68
    %v71 = vadd.f32 %v69, 0.0
    %v72 = vadd.f32 %v70, 0.0
    %73 = vset.pattern.permute.xlu0 1
    %74 = vperm.xlu0 %73, %v61
    %v75 = vpop.permute.xlu0 %74
    %vm76 = vcmp.eq.s32.totalorder %v75, %v59
    %vm77 = vcmp.eq.s32.totalorder %v75, %v60
    %v78 = vsel %vm76, 1, 0
    %v79 = vsel %vm77, 1, 0
    %v80 = vcvt.s32.f32 %v78
    %v81 = vcvt.s32.f32 %v79
    %v82 = vadd.f32 %v71, %v80
    %v83 = vadd.f32 %v72, %v81
    %84 = vset.pattern.permute.xlu0 2
    %85 = vperm.xlu0 %84, %v61
    %v86 = vpop.permute.xlu0 %85
    %vm87 = vcmp.eq.s32.totalorder %v86, %v59
    %vm88 = vcmp.eq.s32.totalorder %v86, %v60
    %v89 = vsel %vm87, 1, 0
    %v90 = vsel %vm88, 1, 0
    %v91 = vcvt.s32.f32 %v89
    %v92 = vcvt.s32.f32 %v90
    %v93 = vadd.f32 %v82, %v91
    %v94 = vadd.f32 %v83, %v92
    %95 = vset.pattern.permute.xlu0 3
    %96 = vperm.xlu0 %95, %v61
    %v97 = vpop.permute.xlu0 %96
    %vm98 = vcmp.eq.s32.totalorder %v97, %v59
    %vm99 = vcmp.eq.s32.totalorder %v97, %v60
    %v100 = vsel %vm98, 1, 0
    %v101 = vsel %vm99, 1, 0
    %v102 = vcvt.s32.f32 %v100
    %v103 = vcvt.s32.f32 %v101
    %v104 = vadd.f32 %v93, %v102
    %v105 = vadd.f32 %v94, %v103
    %106 = vmatprep.subr.mxu0 0.0
    %107 = vmatpush1.msra.mxu0 %v41
    %108 = vmatprep.subr.mxu0 0.0
    %109 = vmatpush1.msra.mxu0 %v40
    %110 = vmatprep.subr.mxu0 0.0
    %111 = vmatpush1.msra.mxu0 %v39
    %112 = vmatprep.subr.mxu0 0.0
    %113 = vmatpush1.msra.mxu0 %v38
    %114 = vmatprep.subr.mxu0 0.0
    %115 = vmatpush1.msra.mxu0 %v37
    %116 = vmatprep.subr.mxu0 0.0
    %117 = vmatpush1.msra.mxu0 %v36
    %118 = vmatprep.subr.mxu0 0.0
    %119 = vmatpush1.msra.mxu0 %v35
    %120 = vmatprep.subr.mxu0 0.0
    %121 = vmatpush1.msra.mxu0 %v34
    %122 = vmatprep.subr.mxu0 0.0
    %123 = vmatpush1.msra.mxu0 %v33
    %124 = vmatprep.subr.mxu0 0.0
    %125 = vmatpush1.msra.mxu0 %v32
    %126 = vmatprep.subr.mxu0 0.0
    %127 = vmatpush1.msra.mxu0 %v31
    %128 = vmatprep.subr.mxu0 0.0
    %129 = vmatpush1.msra.mxu0 %v30
    %130 = vmatprep.subr.mxu0 0.0
    %131 = vmatpush1.msra.mxu0 %v29
    %132 = vmatprep.subr.mxu0 0.0
    %133 = vmatpush1.msra.mxu0 %v28
    %134 = vmatprep.subr.mxu0 0.0
    %135 = vmatpush1.msra.mxu0 %v27
    %136 = vmatprep.subr.mxu0 0.0
    %137 = vmatpush1.msra.mxu0 %v26
    %138 = vmatprep.subr.mxu0 0.0
    %139 = vmatpush2.msra.mxu0 %v57
    %140 = vmatprep.subr.mxu0 0.0
    %141 = vmatpush2.msra.mxu0 %v56
    %142 = vmatprep.subr.mxu0 0.0
    %143 = vmatpush2.msra.mxu0 %v55
    %144 = vmatprep.subr.mxu0 0.0
    %145 = vmatpush2.msra.mxu0 %v54
    %146 = vmatprep.subr.mxu0 0.0
    %147 = vmatpush2.msra.mxu0 %v53
    %148 = vmatprep.subr.mxu0 0.0
    %149 = vmatpush2.msra.mxu0 %v52
    %150 = vmatprep.subr.mxu0 0.0
    %151 = vmatpush2.msra.mxu0 %v51
    %152 = vmatprep.subr.mxu0 0.0
    %153 = vmatpush2.msra.mxu0 %v50
    %154 = vmatprep.subr.mxu0 0.0
    %155 = vmatpush2.msra.mxu0 %v49
    %156 = vmatprep.subr.mxu0 0.0
    %157 = vmatpush2.msra.mxu0 %v48
    %158 = vmatprep.subr.mxu0 0.0
    %159 = vmatpush2.msra.mxu0 %v47
    %160 = vmatprep.subr.mxu0 0.0
    %161 = vmatpush2.msra.mxu0 %v46
    %162 = vmatprep.subr.mxu0 0.0
    %163 = vmatpush2.msra.mxu0 %v45
    %164 = vmatprep.subr.mxu0 0.0
    %165 = vmatpush2.msra.mxu0 %v44
    %166 = vmatprep.subr.mxu0 0.0
    %167 = vmatpush2.msra.mxu0 %v43
    %168 = vmatprep.subr.mxu0 0.0
    %169 = vmatpush2.msra.mxu0 %v42
    %170 = vmatprep.mubr.f32.mxu0 %v105
    %171 = vmatmul.mubr.f32.gmra.mxu0 %v104
    %v172 = vpop.f32.mrf.mxu0
    %v173 = vadd.f32 0.0, %v172
    %v174 = vpop.f32.mrf.mxu0
    %175 = vdwg.mxu0
    %176 = vst [vmem:[#allocation5] sm:$0xff] %v173
    // Predicated region
    $region14: #{tpu_custom_call.1} parent=1 // pred_check
      _
    $region15: #{tpu_custom_call.1} parent=1 // pred_check_branch
      %178 = sbr.rel (0) target = $region17
    $region16: #{tpu_custom_call.1} parent=1 // pred_region
      %s180 = ssub.s32 128, 128
      %181 = vsyncadd [#allocation4], %s180
      %s183 = sshll.u32 [#allocation5], 4
      %s184 = int_to_ptr.vmem [resolvable:$true] %s183
      %186 = dma.vmem_to_hbm [thread:$0]  %s184, 128, %s2, [#allocation4]
    $region17: #{tpu_custom_call.1} parent=1 // pred_fallthru
      _
    // Predicated region
    $region18: #{tpu_custom_call.1} parent=1 // pred_check
      _
    $region19: #{tpu_custom_call.1} parent=1 // pred_check_branch
      %188 = sbr.rel (0) target = $region21
    $region20: #{tpu_custom_call.1} parent=1 // pred_region
      %189 = dma.done [#allocation4], 128
    $region21: #{tpu_custom_call.1} parent=1 // pred_fallthru
      _
    %190 = vsyncpa [#allocation3], 1
    %191 = vsyncpa [#allocation4], 1

</llo_original>
